<compile_context>
chip_gen: v7x
topology: tpu7x:2x2x1
jax: 0.10.0
libtpu: 0.0.40
codegen_flags: <defaults>
</compile_context>

<pallas_src>
import functools
import numpy as np
import jax
import jax.numpy as jnp
from jax import lax
from jax.experimental import pallas as pl
from jax.experimental.pallas import tpu as pltpu


def _round_up(x, m):
    return ((int(x) + m - 1) // m) * m


def _online_triplet_kernel(idx_ref, emb_ref, out_ref, acc_ref, *,
                           margin, p, eps, swap, tile, steps, d_valid, count):
    c = pl.program_id(0)          # parallel slice (TensorCore on v7x)
    t = pl.program_id(1)          # sequential step within the slice

    @pl.when(t == 0)
    def _():
        acc_ref[...] = jnp.zeros_like(acc_ref)

    n_pad, d_pad = emb_ref.shape
    emb = emb_ref[...]            # (n_pad, d_pad) bf16, resident in VMEM
    idx = idx_ref[...]            # (tile, 3) int32

    col = lax.broadcasted_iota(jnp.int32, (tile, n_pad), 1)

    def gather_diff(i_col, j_col):
        # {-1,0,+1}-valued difference of one-hots: exact in bf16, so the MXU
        # matmul returns exactly emb[idx[:, i]] - emb[idx[:, j]] in f32.
        oh_i = (idx[:, i_col:i_col + 1] == col).astype(emb.dtype)
        oh_j = (idx[:, j_col:j_col + 1] == col).astype(emb.dtype)
        return jnp.dot(oh_i - oh_j, emb, preferred_element_type=jnp.float32)

    # torch.pairwise_distance adds eps to the elementwise difference; mask it
    # to the real (unpadded) feature columns so D-padding stays exact.
    lane = lax.broadcasted_iota(jnp.int32, (1, d_pad), 1)
    eps_row = jnp.where(lane < d_valid, jnp.float32(eps), jnp.float32(0.0))

    def pnorm(diff):
        diff = diff + eps_row
        if p == 2:
            return jnp.sqrt(jnp.sum(diff * diff, axis=-1, keepdims=True))
        if p == 1:
            return jnp.sum(jnp.abs(diff), axis=-1, keepdims=True)
        d = jnp.abs(diff) ** p
        return jnp.sum(d, axis=-1, keepdims=True) ** (1.0 / p)

    d_ap = pnorm(gather_diff(0, 1))                 # ||a - p + eps||
    d_an = pnorm(gather_diff(0, 2))                 # ||a - n + eps||
    if swap:
        d_an = jnp.minimum(d_an, pnorm(gather_diff(1, 2)))

    losses = jnp.maximum(d_ap - d_an + margin, 0.0)  # (tile, 1) f32

    # Mask padded triplet rows (they gather row 0 and must not contribute).
    row = (c * steps + t) * tile + lax.broadcasted_iota(jnp.int32, (tile, 1), 0)
    losses = jnp.where(row < count, losses, 0.0)

    acc_ref[...] += jnp.sum(losses, keepdims=True)   # scalar accumulate

    @pl.when(t == steps - 1)
    def _():
        # Per-slice partial sum, broadcast into this slice's (8, 128) block.
        out_ref[...] = jnp.broadcast_to(acc_ref[...], out_ref.shape)


def online_triplet_margin_loss(embeddings, triplets, *, margin=1.0, p=2,
                               eps=1e-6, swap=True, tile=512):
    """Mean triplet margin loss over pre-selected triplet indices.

    embeddings: (N, D) float array (kept fully resident in VMEM as bf16 --
                assumes N_pad*D_pad*2 bytes fits, true for mining batches).
    triplets:   (T, 3) int32 [anchor, positive, negative] row indices.
    """
    T = int(triplets.shape[0])
    N, D = (int(s) for s in embeddings.shape)
    if T == 0:
        # torch's mean reduction over an empty set of triplets is NaN.
        return jnp.array(jnp.nan, dtype=jnp.float32)

    # Pad N (contraction dim) and D (output/lane dim) to the MXU tile.
    n_pad = _round_up(N, 128)
    d_pad = _round_up(D, 128)
    emb = embeddings.astype(jnp.float32)
    if (n_pad, d_pad) != (N, D):
        emb = jnp.pad(emb, ((0, n_pad - N), (0, d_pad - D)))
    emb = emb.astype(jnp.bfloat16)           # bf16 gather: selection is exact

    # Tile selection: multiple of 16 (bf16 sublane packing), clamped so the
    # per-step working set + (double-buffered) resident embeddings fit a
    # conservative VMEM budget valid on v5e (16 MiB scoped) and v7x (64 MiB).
    tile = max(16, min(_round_up(tile, 16), _round_up(T, 16)))
    emb_bytes = 2 * n_pad * d_pad * 2        # resident bf16, double-buffered

    def _step_bytes(t):
        return (3 * t * n_pad * 2 * 2        # one-hot diffs + compare temps
                + 3 * t * d_pad * 4          # gathered f32 differences
                + 2 * t * 3 * 4)             # streamed index block (x2 bufs)

    budget = 20 << 20
    while tile > 16 and emb_bytes + _step_bytes(tile) > budget:
        tile = max(16, _round_up(tile // 2, 16))

    num_tiles = -(-T // tile)
    cores = 2 if num_tiles >= 2 else 1       # split across v7x's 2 TCs
    num_tiles = _round_up(num_tiles, cores)
    steps = num_tiles // cores
    t_pad = num_tiles * tile

    idx = triplets.astype(jnp.int32)
    if t_pad != T:
        idx = jnp.pad(idx, ((0, t_pad - T), (0, 0)))

    kernel = functools.partial(
        _online_triplet_kernel, margin=float(margin), p=p, eps=float(eps),
        swap=bool(swap), tile=tile, steps=steps, d_valid=D, count=T)

    matmuls = 3 if swap else 2
    cost = pl.CostEstimate(
        flops=2 * matmuls * t_pad * n_pad * d_pad,
        transcendentals=0 if p in (1, 2) else 2 * matmuls * t_pad * d_pad,
        bytes_accessed=n_pad * d_pad * 2 + t_pad * 12 + cores * 8 * 128 * 4)

    vmem_need = emb_bytes + _step_bytes(tile) + (2 << 20)
    vmem_limit = int(min(max(vmem_need, 8 << 20), 32 << 20))

    out = pl.pallas_call(
        kernel,
        out_shape=jax.ShapeDtypeStruct((8 * cores, 128), jnp.float32),
        grid_spec=pltpu.PrefetchScalarGridSpec(
            num_scalar_prefetch=0,
            grid=(cores, steps),
            in_specs=[
                # (tile, 3) index block streamed per grid step (tiny).
                pl.BlockSpec((tile, 3), lambda c, t: (c * steps + t, 0)),
                # Full (n_pad, d_pad) bf16 embeddings; constant block index
                # per slice -> fetched from HBM once per core.
                pl.BlockSpec((n_pad, d_pad), lambda c, t: (0, 0)),
            ],
            # One lane-dense (8, 128) partial-sum block per parallel slice.
            out_specs=pl.BlockSpec((8, 128), lambda c, t: (c, 0)),
            scratch_shapes=[pltpu.VMEM((1, 1), jnp.float32)]),
        compiler_params=pltpu.CompilerParams(
            dimension_semantics=("parallel", "arbitrary"),
            vmem_limit_bytes=vmem_limit),
        cost_estimate=cost,
    )(idx, emb)

    partials = out[0::8, 0]                   # one partial sum per slice
    return jnp.sum(partials) * (1.0 / T)


class AllTripletSelector:
    """Deterministic selector: every valid (anchor, positive, negative) triple."""

    def get_triplets(self, embeddings, target):
        labels = np.asarray(target)
        trips = []
        for a in range(len(labels)):
            for pp in range(len(labels)):
                if pp == a or labels[pp] != labels[a]:
                    continue
                for nn in range(len(labels)):
                    if labels[nn] == labels[a]:
                        continue
                    trips.append((a, pp, nn))
        if not trips:
            return jnp.zeros((0, 3), dtype=jnp.int32)
        return jnp.asarray(np.array(trips, dtype=np.int32))


class OnlineTripletLoss:
    """JAX/Pallas port of losses/online_triplet.py::OnlineTripletLoss forward."""

    def __init__(self, margin=1.0, triplet_selector=None, p=2, eps=1e-6, swap=True):
        self.margin = margin
        self.p = p
        self.eps = eps
        self.swap = swap
        self.triplet_selector = triplet_selector

    def forward(self, embeddings, target):
        # Triplet selection is data-dependent host logic (as in the PyTorch
        # module); the row gather, distances, hinge and mean run in Pallas.
        triplets = self.triplet_selector.get_triplets(embeddings, target)
        return online_triplet_margin_loss(embeddings, triplets,
                                          margin=self.margin, p=self.p,
                                          eps=self.eps, swap=self.swap)

    __call__ = forward


def _reference_loss(embeddings, triplets, margin, p, eps, swap):
    a = embeddings[triplets[:, 0]]
    pos = embeddings[triplets[:, 1]]
    neg = embeddings[triplets[:, 2]]

    def pdist(x, y):
        return jnp.sum(jnp.abs(x - y + eps) ** p, axis=-1) ** (1.0 / p)

    d_ap = pdist(a, pos)
    d_an = pdist(a, neg)
    if swap:
        d_an = jnp.minimum(d_an, pdist(pos, neg))
    return jnp.mean(jnp.maximum(d_ap - d_an + margin, 0.0))


if __name__ == "__main__":
    key = jax.random.PRNGKey(0)
    N, D = 8, 32
    embeddings = jax.random.normal(key, (N, D), dtype=jnp.float32)
    target = jnp.array([0, 0, 0, 0, 1, 1, 1, 1], dtype=jnp.int32)

    loss_mod = OnlineTripletLoss(margin=1.0, triplet_selector=AllTripletSelector(),
                                 p=2, eps=1e-6, swap=True)
    triplets = loss_mod.triplet_selector.get_triplets(embeddings, target)

    # Default path (single tile, single slice).
    loss_default = jax.block_until_ready(loss_mod(embeddings, target))
    # Small-tile path: multi-tile, 2 parallel slices, padded triplet rows.
    loss_tiled = jax.block_until_ready(
        online_triplet_margin_loss(embeddings, triplets, margin=1.0, p=2,
                                   eps=1e-6, swap=True, tile=32))

    # The kernel gathers bf16-stored embeddings exactly -> compare tightly
    # against a bf16-rounded reference, loosely against the f32 reference.
    emb_bf16 = embeddings.astype(jnp.bfloat16).astype(jnp.float32)
    ref_bf16 = _reference_loss(emb_bf16, triplets, margin=1.0, p=2, eps=1e-6, swap=True)
    ref_f32 = _reference_loss(embeddings, triplets, margin=1.0, p=2, eps=1e-6, swap=True)

    assert jnp.allclose(loss_default, ref_bf16, atol=1e-4, rtol=1e-4), (loss_default, ref_bf16)
    assert jnp.allclose(loss_tiled, ref_bf16, atol=1e-4, rtol=1e-4), (loss_tiled, ref_bf16)
    assert jnp.allclose(loss_default, ref_f32, atol=5e-2, rtol=5e-2), (loss_default, ref_f32)
    print("KERNEL_OK")
</pallas_src>

<mosaic_0001>
module attributes {stable_mosaic.version = 11 : i64} {
  func.func @_online_triplet_kernel(%arg0: i32, %arg1: i32, %arg2: memref<96x3xi32, #tpu.memory_space<vmem>>, %arg3: memref<128x128xbf16, #tpu.memory_space<vmem>>, %arg4: memref<8x128xf32, #tpu.memory_space<vmem>>, %arg5: memref<1x1xf32, #tpu.memory_space<vmem>>) attributes {dimension_semantics = [#tpu.dimension_semantics<parallel>, #tpu.dimension_semantics<arbitrary>], iteration_bounds = array<i64: 1, 1>, scalar_prefetch = 0 : i64, scratch_operands = 1 : i64, tpu.core_type = #tpu.core_type<tc>, window_params = [{transform_indices = @transform_0, window_bounds = array<i64: 96, 3>}, {pipeline_mode = #tpu.pipeline_mode<synchronous>, transform_indices = @transform_1, window_bounds = array<i64: 128, 128>}, {transform_indices = @transform_2, window_bounds = array<i64: 8, 128>}]} {
    %c0_i32 = arith.constant 0 : i32
    %0 = arith.cmpi eq, %arg1, %c0_i32 : i32
    %1 = arith.extui %0 : i1 to i32
    %c0_i32_0 = arith.constant 0 : i32
    %2 = arith.cmpi ne, %1, %c0_i32_0 : i32
    scf.if %2 {
      %cst_22 = arith.constant 0.000000e+00 : f32
      %99 = vector.broadcast %cst_22 : f32 to vector<1x1xf32>
      %c0_23 = arith.constant 0 : index
      %c0_24 = arith.constant 0 : index
      %100 = vector.load %arg5[%c0_23, %c0_24] : memref<1x1xf32, #tpu.memory_space<vmem>>, vector<1x1xf32>
      tpu.vector_store %arg5[%c0_23, %c0_24], %99 {strides = array<i32>} : memref<1x1xf32, #tpu.memory_space<vmem>>, vector<1x1xf32>,
    } else {
    }
    %c0 = arith.constant 0 : index
    %c0_1 = arith.constant 0 : index
    %3 = vector.load %arg3[%c0, %c0_1] : memref<128x128xbf16, #tpu.memory_space<vmem>>, vector<128x128xbf16>
    %c0_2 = arith.constant 0 : index
    %c0_3 = arith.constant 0 : index
    %4 = vector.load %arg2[%c0_2, %c0_3] : memref<96x3xi32, #tpu.memory_space<vmem>>, vector<96x3xi32>
    %5 = tpu.iota {dimensions = array<i32: 1>} : vector<96x128xi32>
    %6 = tpu.iota {dimensions = array<i32: 1>} : vector<1x128xi32>
    %c32_i32 = arith.constant 32 : i32
    %7 = vector.broadcast %c32_i32 : i32 to vector<1x128xi32>
    %8 = arith.cmpi slt, %6, %7 : vector<1x128xi32>
    %cst = arith.constant 9.99999997E-7 : f32
    %cst_4 = arith.constant 0.000000e+00 : f32
    %9 = vector.broadcast %cst : f32 to vector<1x128xf32>
    %10 = vector.broadcast %cst_4 : f32 to vector<1x128xf32>
    %11 = arith.select %8, %9, %10 : vector<1x128xi1>, vector<1x128xf32>
    %12 = vector.extract_strided_slice %4 {offsets = [0, 0], sizes = [96, 1], strides = [1, 1]} : vector<96x3xi32> to vector<96x1xi32>
    %13 = vector.broadcast %12 : vector<96x1xi32> to vector<96x128xi32>
    %14 = arith.cmpi eq, %13, %5 : vector<96x128xi32>
    %15 = arith.extui %14 : vector<96x128xi1> to vector<96x128xi32>
    %16 = arith.sitofp %15 : vector<96x128xi32> to vector<96x128xf32>
    %17 = arith.truncf %16 : vector<96x128xf32> to vector<96x128xbf16>
    %18 = vector.extract_strided_slice %4 {offsets = [0, 1], sizes = [96, 1], strides = [1, 1]} : vector<96x3xi32> to vector<96x1xi32>
    %19 = vector.broadcast %18 : vector<96x1xi32> to vector<96x128xi32>
    %20 = arith.cmpi eq, %19, %5 : vector<96x128xi32>
    %21 = arith.extui %20 : vector<96x128xi1> to vector<96x128xi32>
    %22 = arith.sitofp %21 : vector<96x128xi32> to vector<96x128xf32>
    %23 = arith.truncf %22 : vector<96x128xf32> to vector<96x128xbf16>
    %24 = arith.subf %17, %23 : vector<96x128xbf16>
    %cst_5 = arith.constant dense<0.000000e+00> : vector<96x128xf32>
    %25 = tpu.matmul %24, %3, %cst_5 {dimension_numbers = #tpu.dot_dimension_numbers<[1], [0], [0], [1], [0, 0, 1, 1], [], []>} : vector<96x128xbf16>, vector<128x128xbf16>, vector<96x128xf32> -> vector<96x128xf32>
    %26 = vector.broadcast %11 : vector<1x128xf32> to vector<96x128xf32>
    %27 = arith.addf %25, %26 : vector<96x128xf32>
    %28 = arith.mulf %27, %27 : vector<96x128xf32>
    %cst_6 = arith.constant dense<0.000000e+00> : vector<96xf32>
    %29 = vector.multi_reduction <add>, %28, %cst_6 [1] : vector<96x128xf32> to vector<96xf32>
    %30 = vector.shape_cast %29 : vector<96xf32> to vector<96x1xf32>
    %31 = math.sqrt %30 : vector<96x1xf32>
    %32 = vector.extract_strided_slice %4 {offsets = [0, 0], sizes = [96, 1], strides = [1, 1]} : vector<96x3xi32> to vector<96x1xi32>
    %33 = vector.broadcast %32 : vector<96x1xi32> to vector<96x128xi32>
    %34 = arith.cmpi eq, %33, %5 : vector<96x128xi32>
    %35 = arith.extui %34 : vector<96x128xi1> to vector<96x128xi32>
    %36 = arith.sitofp %35 : vector<96x128xi32> to vector<96x128xf32>
    %37 = arith.truncf %36 : vector<96x128xf32> to vector<96x128xbf16>
    %38 = vector.extract_strided_slice %4 {offsets = [0, 2], sizes = [96, 1], strides = [1, 1]} : vector<96x3xi32> to vector<96x1xi32>
    %39 = vector.broadcast %38 : vector<96x1xi32> to vector<96x128xi32>
    %40 = arith.cmpi eq, %39, %5 : vector<96x128xi32>
    %41 = arith.extui %40 : vector<96x128xi1> to vector<96x128xi32>
    %42 = arith.sitofp %41 : vector<96x128xi32> to vector<96x128xf32>
    %43 = arith.truncf %42 : vector<96x128xf32> to vector<96x128xbf16>
    %44 = arith.subf %37, %43 : vector<96x128xbf16>
    %cst_7 = arith.constant dense<0.000000e+00> : vector<96x128xf32>
    %45 = tpu.matmul %44, %3, %cst_7 {dimension_numbers = #tpu.dot_dimension_numbers<[1], [0], [0], [1], [0, 0, 1, 1], [], []>} : vector<96x128xbf16>, vector<128x128xbf16>, vector<96x128xf32> -> vector<96x128xf32>
    %46 = vector.broadcast %11 : vector<1x128xf32> to vector<96x128xf32>
    %47 = arith.addf %45, %46 : vector<96x128xf32>
    %48 = arith.mulf %47, %47 : vector<96x128xf32>
    %cst_8 = arith.constant dense<0.000000e+00> : vector<96xf32>
    %49 = vector.multi_reduction <add>, %48, %cst_8 [1] : vector<96x128xf32> to vector<96xf32>
    %50 = vector.shape_cast %49 : vector<96xf32> to vector<96x1xf32>
    %51 = math.sqrt %50 : vector<96x1xf32>
    %52 = vector.extract_strided_slice %4 {offsets = [0, 1], sizes = [96, 1], strides = [1, 1]} : vector<96x3xi32> to vector<96x1xi32>
    %53 = vector.broadcast %52 : vector<96x1xi32> to vector<96x128xi32>
    %54 = arith.cmpi eq, %53, %5 : vector<96x128xi32>
    %55 = arith.extui %54 : vector<96x128xi1> to vector<96x128xi32>
    %56 = arith.sitofp %55 : vector<96x128xi32> to vector<96x128xf32>
    %57 = arith.truncf %56 : vector<96x128xf32> to vector<96x128xbf16>
    %58 = vector.extract_strided_slice %4 {offsets = [0, 2], sizes = [96, 1], strides = [1, 1]} : vector<96x3xi32> to vector<96x1xi32>
    %59 = vector.broadcast %58 : vector<96x1xi32> to vector<96x128xi32>
    %60 = arith.cmpi eq, %59, %5 : vector<96x128xi32>
    %61 = arith.extui %60 : vector<96x128xi1> to vector<96x128xi32>
    %62 = arith.sitofp %61 : vector<96x128xi32> to vector<96x128xf32>
    %63 = arith.truncf %62 : vector<96x128xf32> to vector<96x128xbf16>
    %64 = arith.subf %57, %63 : vector<96x128xbf16>
    %cst_9 = arith.constant dense<0.000000e+00> : vector<96x128xf32>
    %65 = tpu.matmul %64, %3, %cst_9 {dimension_numbers = #tpu.dot_dimension_numbers<[1], [0], [0], [1], [0, 0, 1, 1], [], []>} : vector<96x128xbf16>, vector<128x128xbf16>, vector<96x128xf32> -> vector<96x128xf32>
    %66 = vector.broadcast %11 : vector<1x128xf32> to vector<96x128xf32>
    %67 = arith.addf %65, %66 : vector<96x128xf32>
    %68 = arith.mulf %67, %67 : vector<96x128xf32>
    %cst_10 = arith.constant dense<0.000000e+00> : vector<96xf32>
    %69 = vector.multi_reduction <add>, %68, %cst_10 [1] : vector<96x128xf32> to vector<96xf32>
    %70 = vector.shape_cast %69 : vector<96xf32> to vector<96x1xf32>
    %71 = math.sqrt %70 : vector<96x1xf32>
    %72 = arith.minimumf %51, %71 : vector<96x1xf32>
    %73 = arith.subf %31, %72 : vector<96x1xf32>
    %cst_11 = arith.constant 1.000000e+00 : f32
    %74 = vector.broadcast %cst_11 : f32 to vector<96x1xf32>
    %75 = arith.addf %73, %74 : vector<96x1xf32>
    %cst_12 = arith.constant 0.000000e+00 : f32
    %76 = vector.broadcast %cst_12 : f32 to vector<96x1xf32>
    %77 = arith.maximumf %75, %76 : vector<96x1xf32>
    %c1_i32 = arith.constant 1 : i32
    %78 = arith.muli %arg0, %c1_i32 : i32
    %79 = arith.addi %78, %arg1 : i32
    %c96_i32 = arith.constant 96 : i32
    %80 = arith.muli %79, %c96_i32 : i32
    %81 = tpu.iota {dimensions = array<i32: 0>} : vector<96x1xi32>
    %82 = vector.broadcast %80 : i32 to vector<96x1xi32>
    %83 = arith.addi %82, %81 : vector<96x1xi32>
    %c96_i32_13 = arith.constant 96 : i32
    %84 = vector.broadcast %c96_i32_13 : i32 to vector<96x1xi32>
    %85 = arith.cmpi slt, %83, %84 : vector<96x1xi32>
    %cst_14 = arith.constant 0.000000e+00 : f32
    %86 = vector.broadcast %cst_14 : f32 to vector<96x1xf32>
    %87 = arith.select %85, %77, %86 : vector<96x1xi1>, vector<96x1xf32>
    %c0_15 = arith.constant 0 : index
    %c0_16 = arith.constant 0 : index
    %88 = vector.load %arg5[%c0_15, %c0_16] : memref<1x1xf32, #tpu.memory_space<vmem>>, vector<1x1xf32>
    %89 = vector.shape_cast %87 : vector<96x1xf32> to vector<1x96x1xf32>
    %cst_17 = arith.constant dense<0.000000e+00> : vector<1xf32>
    %90 = vector.multi_reduction <add>, %89, %cst_17 [1, 2] : vector<1x96x1xf32> to vector<1xf32>
    %91 = vector.shape_cast %90 : vector<1xf32> to vector<1x1x1xf32>
    %92 = vector.extract %91[0, 0, 0] : f32 from vector<1x1x1xf32>
    %93 = vector.broadcast %92 : f32 to vector<1x1xf32>
    %94 = arith.addf %88, %93 : vector<1x1xf32>
    %c0_18 = arith.constant 0 : index
    %c0_19 = arith.constant 0 : index
    %95 = vector.load %arg5[%c0_18, %c0_19] : memref<1x1xf32, #tpu.memory_space<vmem>>, vector<1x1xf32>
    tpu.vector_store %arg5[%c0_18, %c0_19], %94 {strides = array<i32>} : memref<1x1xf32, #tpu.memory_space<vmem>>, vector<1x1xf32>,
    %c0_i32_20 = arith.constant 0 : i32
    %96 = arith.cmpi eq, %arg1, %c0_i32_20 : i32
    %97 = arith.extui %96 : i1 to i32
    %c0_i32_21 = arith.constant 0 : i32
    %98 = arith.cmpi ne, %97, %c0_i32_21 : i32
    scf.if %98 {
      %c0_22 = arith.constant 0 : index
      %c0_23 = arith.constant 0 : index
      %99 = vector.load %arg5[%c0_22, %c0_23] : memref<1x1xf32, #tpu.memory_space<vmem>>, vector<1x1xf32>
      %100 = vector.shape_cast %99 : vector<1x1xf32> to vector<1x1xf32>
      %101 = vector.broadcast %100 : vector<1x1xf32> to vector<8x128xf32>
      %c0_24 = arith.constant 0 : index
      %c0_25 = arith.constant 0 : index
      %102 = vector.load %arg4[%c0_24, %c0_25] : memref<8x128xf32, #tpu.memory_space<vmem>>, vector<8x128xf32>
      tpu.vector_store %arg4[%c0_24, %c0_25], %101 {strides = array<i32>} : memref<8x128xf32, #tpu.memory_space<vmem>>, vector<8x128xf32>,
    } else {
    }
    return
  }
  func.func @transform_0(%arg0: i32, %arg1: i32) -> (i32, i32) {
    %c1_i32 = arith.constant 1 : i32
    %0 = arith.muli %arg0, %c1_i32 : i32
    %1 = arith.addi %0, %arg1 : i32
    %c0_i32 = arith.constant 0 : i32
    %c0_i32_0 = arith.constant 0 : i32
    return %1, %c0_i32 : i32, i32
  }
  func.func @transform_1(%arg0: i32, %arg1: i32) -> (i32, i32) {
    %c0_i32 = arith.constant 0 : i32
    %c0_i32_0 = arith.constant 0 : i32
    %c0_i32_1 = arith.constant 0 : i32
    return %c0_i32, %c0_i32_0 : i32, i32
  }
  func.func @transform_2(%arg0: i32, %arg1: i32) -> (i32, i32) {
    %c0_i32 = arith.constant 0 : i32
    %c0_i32_0 = arith.constant 0 : i32
    return %arg0, %c0_i32 : i32, i32
  }
}

</mosaic_0001>

<llo_original>
// kernel: tpu_custom_call.1
$region0: #{tpu_custom_call.1}
  #allocation0 [shape = 'u32[]', space=smem, size = 0x4, offset = 0x4, fixed_abs, tag = 'smem constant byte address 0x4 - core index']
  #allocation1 [shape = 'u32[144,128]{1,0:T(1,128)}', space=vmem, size = 0x12000, scoped, tag = 'internal scratch']
  #allocation2 [shape = 'f32[1,1]{1,0:T(1,128)}', space=vmem, size = 0x200, scoped, tag = 'scratch operand']
  %s0 = inlined_call_operand.vmem [shape: s32[96,3], index: 0, kind: input, shape index: {}]
  %s1 = inlined_call_operand.vmem [shape: bf16[128,128], index: 1, kind: input, shape index: {}]
  %s2 = inlined_call_operand.hbm [shape: f32[8,128], index: 2, kind: output, shape index: {}]
  %s3 = sld [smem:[#allocation0]]
  $region26: #{tpu_custom_call.1} parent=0
    _
  %s5 = ssub.s32 1, %s3
  %s6 = scalar_select 0, %s5, %s3
  $region1: #{tpu_custom_call.1} parent=0
    #allocation3 [shape = 'u8[4096]{0}', space=vmem, size = 0x1000, scoped, tag = 'output window, operand 0, single buffered']
    #allocation4 [shape = 's32[1]{0}', space=sflag, size = 0x4, scoped, tag = 'scoped memory for tpu_custom_call.1']
    %7 = vsyncpa [#allocation4], 0
    // Predicated region
    $region2: #{tpu_custom_call.1} parent=1 // pred_check
      _
    $region3: #{tpu_custom_call.1} parent=1 // pred_check_branch
      %9 = sbr.rel (0) target = $region5
    $region4: #{tpu_custom_call.1} parent=1 // pred_region
      %s10 = sadd.s32 0, 0
      %s11 = smul.u32 12, %s10
      %p12 = scmp.lt.s32.totalorder %s11, 11
      %s13 = scalar_select %p12, %s11, 11
      %s14 = smul.addr %s13, 8
      %s15 = scalar_lea.vmem %s0, %s14
      %s16 = sadd.s32 0, 0
      %s17 = smul.u32 12, %s16
    $region5: #{tpu_custom_call.1} parent=1 // pred_fallthru
      _
    // Predicated region
    $region6: #{tpu_custom_call.1} parent=1 // pred_check
      _
    $region7: #{tpu_custom_call.1} parent=1 // pred_check_branch
      %19 = sbr.rel (0) target = $region9
    $region8: #{tpu_custom_call.1} parent=1 // pred_region
      _
    $region9: #{tpu_custom_call.1} parent=1 // pred_fallthru
      _
    %s20 = sadd.s32 0, 0
    %s21 = smul.u32 12, %s20
    %p22 = scmp.lt.s32.totalorder %s21, 11
    %s23 = scalar_select %p22, %s21, 11
    %s24 = smul.addr %s23, 8
    %s25 = scalar_lea.vmem %s0, %s24
    %s26 = sadd.s32 0, 0
    %s27 = smul.u32 12, %s26
    %p28 = scmp.lt.s32.totalorder %s27, 11
    %s29 = scalar_select %p28, %s27, 11
    %s30 = smul.addr %s29, 8
    %s31 = scalar_lea.vmem %s0, %s30
    %s32 = sadd.s32 0, 0
    %s33 = smul.u32 12, %s32
    %p35 = scmp.eq.s32.totalorder 0, 0
    // Predicated region
    $region10: #{tpu_custom_call.1} parent=1 // pred_check
      %p36 = pneg %p35
    $region11: #{tpu_custom_call.1} parent=1 // pred_check_branch
      %38 = sbr.rel (%p36) target = $region13
    $region12: #{tpu_custom_call.1} parent=1 // pred_region
      %vm39 = vcmask 0
      %40 = vst.msk [vmem:[#allocation2] sm:$0x1] %vm39, 0.0
    $region13: #{tpu_custom_call.1} parent=1 // pred_fallthru
      _
    %v41 = vld [vmem:[%s1] sm:$0xf]
    %v42 = vld [vmem:[%s1 + $0x4] sm:$0xf]
    %v43 = vld [vmem:[%s1 + $0x8] sm:$0xf]
    %v44 = vld [vmem:[%s1 + $0xc] sm:$0xf]
    %v45 = vld [vmem:[%s1 + $0x10] sm:$0xf]
    %v46 = vld [vmem:[%s1 + $0x14] sm:$0xf]
    %v47 = vld [vmem:[%s1 + $0x18] sm:$0xf]
    %v48 = vld [vmem:[%s1 + $0x1c] sm:$0xf]
    %v49 = vld [vmem:[%s1 + $0x20] sm:$0xf]
    %v50 = vld [vmem:[%s1 + $0x24] sm:$0xf]
    %v51 = vld [vmem:[%s1 + $0x28] sm:$0xf]
    %v52 = vld [vmem:[%s1 + $0x2c] sm:$0xf]
    %v53 = vld [vmem:[%s1 + $0x30] sm:$0xf]
    %v54 = vld [vmem:[%s1 + $0x34] sm:$0xf]
    %v55 = vld [vmem:[%s1 + $0x38] sm:$0xf]
    %v56 = vld [vmem:[%s1 + $0x3c] sm:$0xf]
    %v57 = vld [vmem:[%s31] sm:$0xff]
    %v58 = vld [vmem:[%s31 + $0x8] sm:$0xff]
    %v59 = vld [vmem:[%s31 + $0x10] sm:$0xff]
    %v60 = vld [vmem:[%s31 + $0x18] sm:$0xff]
    %v61 = vld [vmem:[%s31 + $0x20] sm:$0xff]
    %v62 = vld [vmem:[%s31 + $0x28] sm:$0xff]
    %v63 = vld [vmem:[%s31 + $0x30] sm:$0xff]
    %v64 = vld [vmem:[%s31 + $0x38] sm:$0xff]
    %v65 = vld [vmem:[%s31 + $0x40] sm:$0xff]
    %v66 = vld [vmem:[%s31 + $0x48] sm:$0xff]
    %v67 = vld [vmem:[%s31 + $0x50] sm:$0xff]
    %v68 = vld [vmem:[%s31 + $0x58] sm:$0xff]
    %v69 = vlaneseq
    %v70 = vand.u32 %v69, 127
    %vm71 = vcmp.lt.s32.totalorder %v70, 32
    %v72 = vsel %vm71, 1e-06, 0.0
    %73 = vset.pattern.permute.xlu0 0
    %74 = vperm.xlu0 %73, %v57
    %v75 = vpop.permute.xlu0 %74
    %76 = vset.pattern.permute.xlu0 0
    %77 = vperm.xlu0 %76, %v58
    %v78 = vpop.permute.xlu0 %77
    %79 = vset.pattern.permute.xlu0 0
    %80 = vperm.xlu0 %79, %v59
    %v81 = vpop.permute.xlu0 %80
    %82 = vset.pattern.permute.xlu0 0
    %83 = vperm.xlu0 %82, %v60
    %v84 = vpop.permute.xlu0 %83
    %85 = vset.pattern.permute.xlu0 0
    %86 = vperm.xlu0 %85, %v61
    %v87 = vpop.permute.xlu0 %86
    %88 = vset.pattern.permute.xlu0 0
    %89 = vperm.xlu0 %88, %v62
    %v90 = vpop.permute.xlu0 %89
    %91 = vset.pattern.permute.xlu0 0
    %92 = vperm.xlu0 %91, %v63
    %v93 = vpop.permute.xlu0 %92
    %94 = vset.pattern.permute.xlu0 0
    %95 = vperm.xlu0 %94, %v64
    %v96 = vpop.permute.xlu0 %95
    %97 = vset.pattern.permute.xlu0 0
    %98 = vperm.xlu0 %97, %v65
    %v99 = vpop.permute.xlu0 %98
    %100 = vset.pattern.permute.xlu0 0
    %101 = vperm.xlu0 %100, %v66
    %v102 = vpop.permute.xlu0 %101
    %103 = vset.pattern.permute.xlu0 0
    %104 = vperm.xlu0 %103, %v67
    %v105 = vpop.permute.xlu0 %104
    %106 = vset.pattern.permute.xlu0 0
    %107 = vperm.xlu0 %106, %v68
    %v108 = vpop.permute.xlu0 %107
    %vm109 = vcmp.eq.s32.totalorder %v75, %v70
    %vm110 = vcmp.eq.s32.totalorder %v78, %v70
    %vm111 = vcmp.eq.s32.totalorder %v81, %v70
    %vm112 = vcmp.eq.s32.totalorder %v84, %v70
    %vm113 = vcmp.eq.s32.totalorder %v87, %v70
    %vm114 = vcmp.eq.s32.totalorder %v90, %v70
    %vm115 = vcmp.eq.s32.totalorder %v93, %v70
    %vm116 = vcmp.eq.s32.totalorder %v96, %v70
    %vm117 = vcmp.eq.s32.totalorder %v99, %v70
    %vm118 = vcmp.eq.s32.totalorder %v102, %v70
    %vm119 = vcmp.eq.s32.totalorder %v105, %v70
    %vm120 = vcmp.eq.s32.totalorder %v108, %v70
    %v121 = vsel %vm109, 1, 0
    %v122 = vsel %vm110, 1, 0
    %v123 = vsel %vm111, 1, 0
    %v124 = vsel %vm112, 1, 0
    %v125 = vsel %vm113, 1, 0
    %v126 = vsel %vm114, 1, 0
    %v127 = vsel %vm115, 1, 0
    %v128 = vsel %vm116, 1, 0
    %v129 = vsel %vm117, 1, 0
    %v130 = vsel %vm118, 1, 0
    %v131 = vsel %vm119, 1, 0
    %v132 = vsel %vm120, 1, 0
    %v133 = vcvt.s32.f32 %v121
    %v134 = vcvt.s32.f32 %v122
    %v135 = vcvt.s32.f32 %v123
    %v136 = vcvt.s32.f32 %v124
    %v137 = vcvt.s32.f32 %v125
    %v138 = vcvt.s32.f32 %v126
    %v139 = vcvt.s32.f32 %v127
    %v140 = vcvt.s32.f32 %v128
    %v141 = vcvt.s32.f32 %v129
    %v142 = vcvt.s32.f32 %v130
    %v143 = vcvt.s32.f32 %v131
    %v144 = vcvt.s32.f32 %v132
    %v145 = vpack.c.bf16 %v134, %v133
    %v146 = vpack.c.bf16 %v136, %v135
    %v147 = vpack.c.bf16 %v138, %v137
    %v148 = vpack.c.bf16 %v140, %v139
    %v149 = vpack.c.bf16 %v142, %v141
    %v150 = vpack.c.bf16 %v144, %v143
    %151 = vset.pattern.permute.xlu0 1
    %152 = vperm.xlu0 %151, %v57
    %v153 = vpop.permute.xlu0 %152
    %154 = vset.pattern.permute.xlu0 1
    %155 = vperm.xlu0 %154, %v58
    %v156 = vpop.permute.xlu0 %155
    %157 = vset.pattern.permute.xlu0 1
    %158 = vperm.xlu0 %157, %v59
    %v159 = vpop.permute.xlu0 %158
    %160 = vset.pattern.permute.xlu0 1
    %161 = vperm.xlu0 %160, %v60
    %v162 = vpop.permute.xlu0 %161
    %163 = vset.pattern.permute.xlu0 1
    %164 = vperm.xlu0 %163, %v61
    %v165 = vpop.permute.xlu0 %164
    %166 = vset.pattern.permute.xlu0 1
    %167 = vperm.xlu0 %166, %v62
    %v168 = vpop.permute.xlu0 %167
    %169 = vset.pattern.permute.xlu0 1
    %170 = vperm.xlu0 %169, %v63
    %v171 = vpop.permute.xlu0 %170
    %172 = vset.pattern.permute.xlu0 1
    %173 = vperm.xlu0 %172, %v64
    %v174 = vpop.permute.xlu0 %173
    %175 = vset.pattern.permute.xlu0 1
    %176 = vperm.xlu0 %175, %v65
    %v177 = vpop.permute.xlu0 %176
    %178 = vset.pattern.permute.xlu0 1
    %179 = vperm.xlu0 %178, %v66
    %v180 = vpop.permute.xlu0 %179
    %181 = vset.pattern.permute.xlu0 1
    %182 = vperm.xlu0 %181, %v67
    %v183 = vpop.permute.xlu0 %182
    %184 = vset.pattern.permute.xlu0 1
    %185 = vperm.xlu0 %184, %v68
    %v186 = vpop.permute.xlu0 %185
    %vm187 = vcmp.eq.s32.totalorder %v153, %v70
    %vm188 = vcmp.eq.s32.totalorder %v156, %v70
    %vm189 = vcmp.eq.s32.totalorder %v159, %v70
    %vm190 = vcmp.eq.s32.totalorder %v162, %v70
    %vm191 = vcmp.eq.s32.totalorder %v165, %v70
    %vm192 = vcmp.eq.s32.totalorder %v168, %v70
    %vm193 = vcmp.eq.s32.totalorder %v171, %v70
    %vm194 = vcmp.eq.s32.totalorder %v174, %v70
    %vm195 = vcmp.eq.s32.totalorder %v177, %v70
    %vm196 = vcmp.eq.s32.totalorder %v180, %v70
    %vm197 = vcmp.eq.s32.totalorder %v183, %v70
    %vm198 = vcmp.eq.s32.totalorder %v186, %v70
    %v199 = vsel %vm187, 1, 0
    %v200 = vsel %vm188, 1, 0
    %v201 = vsel %vm189, 1, 0
    %v202 = vsel %vm190, 1, 0
    %v203 = vsel %vm191, 1, 0
    %v204 = vsel %vm192, 1, 0
    %v205 = vsel %vm193, 1, 0
    %v206 = vsel %vm194, 1, 0
    %v207 = vsel %vm195, 1, 0
    %v208 = vsel %vm196, 1, 0
    %v209 = vsel %vm197, 1, 0
    %v210 = vsel %vm198, 1, 0
    %v211 = vcvt.s32.f32 %v199
    %v212 = vcvt.s32.f32 %v200
    %v213 = vcvt.s32.f32 %v201
    %v214 = vcvt.s32.f32 %v202
    %v215 = vcvt.s32.f32 %v203
    %v216 = vcvt.s32.f32 %v204
    %v217 = vcvt.s32.f32 %v205
    %v218 = vcvt.s32.f32 %v206
    %v219 = vcvt.s32.f32 %v207
    %v220 = vcvt.s32.f32 %v208
    %v221 = vcvt.s32.f32 %v209
    %v222 = vcvt.s32.f32 %v210
    %v223 = vpack.c.bf16 %v212, %v211
    %v224 = vpack.c.bf16 %v214, %v213
    %v225 = vpack.c.bf16 %v216, %v215
    %v226 = vpack.c.bf16 %v218, %v217
    %v227 = vpack.c.bf16 %v220, %v219
    %v228 = vpack.c.bf16 %v222, %v221
    %v229 = vsub.bf16 %v145, %v223
    %v230 = vsub.bf16 %v146, %v224
    %v231 = vsub.bf16 %v147, %v225
    %v232 = vsub.bf16 %v148, %v226
    %v233 = vsub.bf16 %v149, %v227
    %v234 = vsub.bf16 %v150, %v228
    %v251 = vunpack.c.l.b16 %v41
    %v252 = vunpack.c.l.b16 %v42
    %v253 = vunpack.c.l.b16 %v43
    %v254 = vunpack.c.l.b16 %v44
    %v255 = vunpack.c.l.b16 %v45
    %v256 = vunpack.c.l.b16 %v46
    %v257 = vunpack.c.l.b16 %v47
    %v258 = vunpack.c.l.b16 %v48
    %v259 = vunpack.c.l.b16 %v49
    %v260 = vunpack.c.l.b16 %v50
    %v261 = vunpack.c.l.b16 %v51
    %v262 = vunpack.c.l.b16 %v52
    %v263 = vunpack.c.l.b16 %v53
    %v264 = vunpack.c.l.b16 %v54
    %v265 = vunpack.c.l.b16 %v55
    %v266 = vunpack.c.l.b16 %v56
    %v267 = vpack.c.b16 %v252, %v251
    %v268 = vpack.c.b16 %v254, %v253
    %v269 = vpack.c.b16 %v256, %v255
    %v270 = vpack.c.b16 %v258, %v257
    %v271 = vpack.c.b16 %v260, %v259
    %v272 = vpack.c.b16 %v262, %v261
    %v273 = vpack.c.b16 %v264, %v263
    %v274 = vpack.c.b16 %v266, %v265
    %283 = vmatprep.subr.bf16.mxu0 0
    %284 = vmatpush1.bf16.msra.mxu0 %v267
    %285 = vmatprep.subr.bf16.mxu0 0
    %286 = vmatpush1.bf16.msra.mxu0 %v268
    %287 = vmatprep.subr.bf16.mxu0 0
    %288 = vmatpush1.bf16.msra.mxu0 %v269
    %289 = vmatprep.subr.bf16.mxu0 0
    %290 = vmatpush1.bf16.msra.mxu0 %v270
    %291 = vmatprep.subr.bf16.mxu0 0
    %292 = vmatpush1.bf16.msra.mxu0 %v271
    %293 = vmatprep.subr.bf16.mxu0 0
    %294 = vmatpush1.bf16.msra.mxu0 %v272
    %295 = vmatprep.subr.bf16.mxu0 0
    %296 = vmatpush1.bf16.msra.mxu0 %v273
    %297 = vmatprep.subr.bf16.mxu0 0
    %298 = vmatpush1.bf16.msra.mxu0 %v274
    %299 = vmatprep.subr.bf16.mxu0 0
    %300 = vmatpush1.bf16.msra.mxu0 0
    %301 = vmatprep.subr.bf16.mxu0 0
    %302 = vmatpush1.bf16.msra.mxu0 0
    %303 = vmatprep.subr.bf16.mxu0 0
    %304 = vmatpush1.bf16.msra.mxu0 0
    %305 = vmatprep.subr.bf16.mxu0 0
    %306 = vmatpush1.bf16.msra.mxu0 0
    %307 = vmatprep.subr.bf16.mxu0 0
    %308 = vmatpush1.bf16.msra.mxu0 0
    %309 = vmatprep.subr.bf16.mxu0 0
    %310 = vmatpush1.bf16.msra.mxu0 0
    %311 = vmatprep.subr.bf16.mxu0 0
    %312 = vmatpush1.bf16.msra.mxu0 0
    %313 = vmatprep.subr.bf16.mxu0 0
    %314 = vmatpush1.bf16.msra.mxu0 0
    %315 = vmatprep.mubr.bf16.mxu0 0
    %316 = vmatmul.mubr.bf16.gmra.mrb[0].mxu0 %v229
    %v317 = vpop.f32.mrb[0].mxu0
    %v318 = vadd.f32 %v72, %v317
    %v319 = vpop.f32.mrb[0].mxu0
    %v320 = vpop.f32.mrb[0].mxu0
    %v321 = vadd.f32 %v72, %v320
    %v322 = vpop.f32.mrb[0].mxu0
    %323 = vmatprep.mubr.bf16.mxu0 0
    %324 = vmatmul.mubr.bf16.gmra.mrb[0].mxu0 %v230
    %v325 = vpop.f32.mrb[0].mxu0
    %v326 = vadd.f32 %v72, %v325
    %v327 = vpop.f32.mrb[0].mxu0
    %v328 = vpop.f32.mrb[0].mxu0
    %v329 = vadd.f32 %v72, %v328
    %v330 = vpop.f32.mrb[0].mxu0
    %331 = vmatprep.mubr.bf16.mxu0 0
    %332 = vmatmul.mubr.bf16.gmra.mrb[0].mxu0 %v231
    %v333 = vpop.f32.mrb[0].mxu0
    %v334 = vadd.f32 %v72, %v333
    %v335 = vpop.f32.mrb[0].mxu0
    %v336 = vpop.f32.mrb[0].mxu0
    %v337 = vadd.f32 %v72, %v336
    %v338 = vpop.f32.mrb[0].mxu0
    %339 = vmatprep.mubr.bf16.mxu0 0
    %340 = vmatmul.mubr.bf16.gmra.mrb[0].mxu0 %v232
    %v341 = vpop.f32.mrb[0].mxu0
    %v342 = vadd.f32 %v72, %v341
    %v343 = vpop.f32.mrb[0].mxu0
    %v344 = vpop.f32.mrb[0].mxu0
    %v345 = vadd.f32 %v72, %v344
    %v346 = vpop.f32.mrb[0].mxu0
    %347 = vmatprep.mubr.bf16.mxu0 0
    %348 = vmatmul.mubr.bf16.gmra.mrb[0].mxu0 %v233
    %v349 = vpop.f32.mrb[0].mxu0
    %v350 = vadd.f32 %v72, %v349
    %v351 = vpop.f32.mrb[0].mxu0
    %v352 = vpop.f32.mrb[0].mxu0
    %v353 = vadd.f32 %v72, %v352
    %v354 = vpop.f32.mrb[0].mxu0
    %355 = vmatprep.mubr.bf16.mxu0 0
    %356 = vmatmul.mubr.bf16.gmra.mrb[0].mxu0 %v234
    %v357 = vpop.f32.mrb[0].mxu0
    %v358 = vadd.f32 %v72, %v357
    %v359 = vpop.f32.mrb[0].mxu0
    %v360 = vpop.f32.mrb[0].mxu0
    %v361 = vadd.f32 %v72, %v360
    %v362 = vpop.f32.mrb[0].mxu0
    %363 = vdwg.mxu0
    %v364 = vmul.f32 %v318, %v318
    %v365 = vmul.f32 %v321, %v321
    %v366 = vmul.f32 %v326, %v326
    %v367 = vmul.f32 %v329, %v329
    %v368 = vmul.f32 %v334, %v334
    %v369 = vmul.f32 %v337, %v337
    %v370 = vmul.f32 %v342, %v342
    %v371 = vmul.f32 %v345, %v345
    %v372 = vmul.f32 %v350, %v350
    %v373 = vmul.f32 %v353, %v353
    %v374 = vmul.f32 %v358, %v358
    %v375 = vmul.f32 %v361, %v361
    %376 = vadd.xlane.f32.xlu0 %v364
    %v377 = vpop.xlane.xlu0 %376
    %378 = vadd.xlane.f32.xlu0 %v365
    %v379 = vpop.xlane.xlu0 %378
    %380 = vadd.xlane.f32.xlu0 %v366
    %v381 = vpop.xlane.xlu0 %380
    %382 = vadd.xlane.f32.xlu0 %v367
    %v383 = vpop.xlane.xlu0 %382
    %384 = vadd.xlane.f32.xlu0 %v368
    %v385 = vpop.xlane.xlu0 %384
    %386 = vadd.xlane.f32.xlu0 %v369
    %v387 = vpop.xlane.xlu0 %386
    %388 = vadd.xlane.f32.xlu0 %v370
    %v389 = vpop.xlane.xlu0 %388
    %390 = vadd.xlane.f32.xlu0 %v371
    %v391 = vpop.xlane.xlu0 %390
    %392 = vadd.xlane.f32.xlu0 %v372
    %v393 = vpop.xlane.xlu0 %392
    %394 = vadd.xlane.f32.xlu0 %v373
    %v395 = vpop.xlane.xlu0 %394
    %396 = vadd.xlane.f32.xlu0 %v374
    %v397 = vpop.xlane.xlu0 %396
    %398 = vadd.xlane.f32.xlu0 %v375
    %v399 = vpop.xlane.xlu0 %398
    %v400 = vrsqrt.pop %v377
    %v401 = vmul.f32 %v377, %v400
    %vm402 = vcmp.eq.f32.partialorder %v377, inf
    %v403 = vsel %vm402, %v377, %v401
    %vm404 = vcmp.eq.f32.partialorder %v377, 0.0
    %v405 = vand.u32 %v377, 2147483648
    %v406 = vsel %vm404, %v405, %v403
    %v407 = vrsqrt.pop %v379
    %v408 = vmul.f32 %v379, %v407
    %vm409 = vcmp.eq.f32.partialorder %v379, inf
    %v410 = vsel %vm409, %v379, %v408
    %vm411 = vcmp.eq.f32.partialorder %v379, 0.0
    %v412 = vand.u32 %v379, 2147483648
    %v413 = vsel %vm411, %v412, %v410
    %v414 = vrsqrt.pop %v381
    %v415 = vmul.f32 %v381, %v414
    %vm416 = vcmp.eq.f32.partialorder %v381, inf
    %v417 = vsel %vm416, %v381, %v415
    %vm418 = vcmp.eq.f32.partialorder %v381, 0.0
    %v419 = vand.u32 %v381, 2147483648
    %v420 = vsel %vm418, %v419, %v417
    %v421 = vrsqrt.pop %v383
    %v422 = vmul.f32 %v383, %v421
    %vm423 = vcmp.eq.f32.partialorder %v383, inf
    %v424 = vsel %vm423, %v383, %v422
    %vm425 = vcmp.eq.f32.partialorder %v383, 0.0
    %v426 = vand.u32 %v383, 2147483648
    %v427 = vsel %vm425, %v426, %v424
    %v428 = vrsqrt.pop %v385
    %v429 = vmul.f32 %v385, %v428
    %vm430 = vcmp.eq.f32.partialorder %v385, inf
    %v431 = vsel %vm430, %v385, %v429
    %vm432 = vcmp.eq.f32.partialorder %v385, 0.0
    %v433 = vand.u32 %v385, 2147483648
    %v434 = vsel %vm432, %v433, %v431
    %v435 = vrsqrt.pop %v387
    %v436 = vmul.f32 %v387, %v435
    %vm437 = vcmp.eq.f32.partialorder %v387, inf
    %v438 = vsel %vm437, %v387, %v436
    %vm439 = vcmp.eq.f32.partialorder %v387, 0.0
    %v440 = vand.u32 %v387, 2147483648
    %v441 = vsel %vm439, %v440, %v438
    %v442 = vrsqrt.pop %v389
    %v443 = vmul.f32 %v389, %v442
    %vm444 = vcmp.eq.f32.partialorder %v389, inf
    %v445 = vsel %vm444, %v389, %v443
    %vm446 = vcmp.eq.f32.partialorder %v389, 0.0
    %v447 = vand.u32 %v389, 2147483648
    %v448 = vsel %vm446, %v447, %v445
    %v449 = vrsqrt.pop %v391
    %v450 = vmul.f32 %v391, %v449
    %vm451 = vcmp.eq.f32.partialorder %v391, inf
    %v452 = vsel %vm451, %v391, %v450
    %vm453 = vcmp.eq.f32.partialorder %v391, 0.0
    %v454 = vand.u32 %v391, 2147483648
    %v455 = vsel %vm453, %v454, %v452
    %v456 = vrsqrt.pop %v393
    %v457 = vmul.f32 %v393, %v456
    %vm458 = vcmp.eq.f32.partialorder %v393, inf
    %v459 = vsel %vm458, %v393, %v457
    %vm460 = vcmp.eq.f32.partialorder %v393, 0.0
    %v461 = vand.u32 %v393, 2147483648
    %v462 = vsel %vm460, %v461, %v459
    %v463 = vrsqrt.pop %v395
    %v464 = vmul.f32 %v395, %v463
    %vm465 = vcmp.eq.f32.partialorder %v395, inf
    %v466 = vsel %vm465, %v395, %v464
    %vm467 = vcmp.eq.f32.partialorder %v395, 0.0
    %v468 = vand.u32 %v395, 2147483648
    %v469 = vsel %vm467, %v468, %v466
    %v470 = vrsqrt.pop %v397
    %v471 = vmul.f32 %v397, %v470
    %vm472 = vcmp.eq.f32.partialorder %v397, inf
    %v473 = vsel %vm472, %v397, %v471
    %vm474 = vcmp.eq.f32.partialorder %v397, 0.0
    %v475 = vand.u32 %v397, 2147483648
    %v476 = vsel %vm474, %v475, %v473
    %v477 = vrsqrt.pop %v399
    %v478 = vmul.f32 %v399, %v477
    %vm479 = vcmp.eq.f32.partialorder %v399, inf
    %v480 = vsel %vm479, %v399, %v478
    %vm481 = vcmp.eq.f32.partialorder %v399, 0.0
    %v482 = vand.u32 %v399, 2147483648
    %v483 = vsel %vm481, %v482, %v480
    %484 = vset.pattern.permute.xlu0 2
    %485 = vperm.xlu0 %484, %v57
    %v486 = vpop.permute.xlu0 %485
    %487 = vset.pattern.permute.xlu0 2
    %488 = vperm.xlu0 %487, %v58
    %v489 = vpop.permute.xlu0 %488
    %490 = vset.pattern.permute.xlu0 2
    %491 = vperm.xlu0 %490, %v59
    %v492 = vpop.permute.xlu0 %491
    %493 = vset.pattern.permute.xlu0 2
    %494 = vperm.xlu0 %493, %v60
    %v495 = vpop.permute.xlu0 %494
    %496 = vset.pattern.permute.xlu0 2
    %497 = vperm.xlu0 %496, %v61
    %v498 = vpop.permute.xlu0 %497
    %499 = vset.pattern.permute.xlu0 2
    %500 = vperm.xlu0 %499, %v62
    %v501 = vpop.permute.xlu0 %500
    %502 = vset.pattern.permute.xlu0 2
    %503 = vperm.xlu0 %502, %v63
    %v504 = vpop.permute.xlu0 %503
    %505 = vset.pattern.permute.xlu0 2
    %506 = vperm.xlu0 %505, %v64
    %v507 = vpop.permute.xlu0 %506
    %508 = vset.pattern.permute.xlu0 2
    %509 = vperm.xlu0 %508, %v65
    %v510 = vpop.permute.xlu0 %509
    %511 = vset.pattern.permute.xlu0 2
    %512 = vperm.xlu0 %511, %v66
    %v513 = vpop.permute.xlu0 %512
    %514 = vset.pattern.permute.xlu0 2
    %515 = vperm.xlu0 %514, %v67
    %v516 = vpop.permute.xlu0 %515
    %517 = vset.pattern.permute.xlu0 2
    %518 = vperm.xlu0 %517, %v68
    %v519 = vpop.permute.xlu0 %518
    %vm520 = vcmp.eq.s32.totalorder %v486, %v70
    %vm521 = vcmp.eq.s32.totalorder %v489, %v70
    %vm522 = vcmp.eq.s32.totalorder %v492, %v70
    %vm523 = vcmp.eq.s32.totalorder %v495, %v70
    %vm524 = vcmp.eq.s32.totalorder %v498, %v70
    %vm525 = vcmp.eq.s32.totalorder %v501, %v70
    %vm526 = vcmp.eq.s32.totalorder %v504, %v70
    %vm527 = vcmp.eq.s32.totalorder %v507, %v70
    %vm528 = vcmp.eq.s32.totalorder %v510, %v70
    %vm529 = vcmp.eq.s32.totalorder %v513, %v70
    %vm530 = vcmp.eq.s32.totalorder %v516, %v70
    %vm531 = vcmp.eq.s32.totalorder %v519, %v70
    %v532 = vsel %vm520, 1, 0
    %v533 = vsel %vm521, 1, 0
    %v534 = vsel %vm522, 1, 0
    %v535 = vsel %vm523, 1, 0
    %v536 = vsel %vm524, 1, 0
    %v537 = vsel %vm525, 1, 0
    %v538 = vsel %vm526, 1, 0
    %v539 = vsel %vm527, 1, 0
    %v540 = vsel %vm528, 1, 0
    %v541 = vsel %vm529, 1, 0
    %v542 = vsel %vm530, 1, 0
    %v543 = vsel %vm531, 1, 0
    %v544 = vcvt.s32.f32 %v532
    %v545 = vcvt.s32.f32 %v533
    %v546 = vcvt.s32.f32 %v534
    %v547 = vcvt.s32.f32 %v535
    %v548 = vcvt.s32.f32 %v536
    %v549 = vcvt.s32.f32 %v537
    %v550 = vcvt.s32.f32 %v538
    %v551 = vcvt.s32.f32 %v539
    %v552 = vcvt.s32.f32 %v540
    %v553 = vcvt.s32.f32 %v541
    %v554 = vcvt.s32.f32 %v542
    %v555 = vcvt.s32.f32 %v543
    %v556 = vpack.c.bf16 %v545, %v544
    %v557 = vpack.c.bf16 %v547, %v546
    %v558 = vpack.c.bf16 %v549, %v548
    %v559 = vpack.c.bf16 %v551, %v550
    %v560 = vpack.c.bf16 %v553, %v552
    %v561 = vpack.c.bf16 %v555, %v554
    %v562 = vsub.bf16 %v145, %v556
    %v563 = vsub.bf16 %v146, %v557
    %v564 = vsub.bf16 %v147, %v558
    %v565 = vsub.bf16 %v148, %v559
    %v566 = vsub.bf16 %v149, %v560
    %v567 = vsub.bf16 %v150, %v561
    %568 = vmatprep.subr.bf16.mxu0 0
    %569 = vmatpush1.bf16.msra.mxu0 %v267
    %570 = vmatprep.subr.bf16.mxu0 0
    %571 = vmatpush1.bf16.msra.mxu0 %v268
    %572 = vmatprep.subr.bf16.mxu0 0
    %573 = vmatpush1.bf16.msra.mxu0 %v269
    %574 = vmatprep.subr.bf16.mxu0 0
    %575 = vmatpush1.bf16.msra.mxu0 %v270
    %576 = vmatprep.subr.bf16.mxu0 0
    %577 = vmatpush1.bf16.msra.mxu0 %v271
    %578 = vmatprep.subr.bf16.mxu0 0
    %579 = vmatpush1.bf16.msra.mxu0 %v272
    %580 = vmatprep.subr.bf16.mxu0 0
    %581 = vmatpush1.bf16.msra.mxu0 %v273
    %582 = vmatprep.subr.bf16.mxu0 0
    %583 = vmatpush1.bf16.msra.mxu0 %v274
    %584 = vmatprep.subr.bf16.mxu0 0
    %585 = vmatpush1.bf16.msra.mxu0 0
    %586 = vmatprep.subr.bf16.mxu0 0
    %587 = vmatpush1.bf16.msra.mxu0 0
    %588 = vmatprep.subr.bf16.mxu0 0
    %589 = vmatpush1.bf16.msra.mxu0 0
    %590 = vmatprep.subr.bf16.mxu0 0
    %591 = vmatpush1.bf16.msra.mxu0 0
    %592 = vmatprep.subr.bf16.mxu0 0
    %593 = vmatpush1.bf16.msra.mxu0 0
    %594 = vmatprep.subr.bf16.mxu0 0
    %595 = vmatpush1.bf16.msra.mxu0 0
    %596 = vmatprep.subr.bf16.mxu0 0
    %597 = vmatpush1.bf16.msra.mxu0 0
    %598 = vmatprep.subr.bf16.mxu0 0
    %599 = vmatpush1.bf16.msra.mxu0 0
    %600 = vmatprep.mubr.bf16.mxu0 0
    %601 = vmatmul.mubr.bf16.gmra.mrb[0].mxu0 %v562
    %v602 = vpop.f32.mrb[0].mxu0
    %v603 = vadd.f32 %v72, %v602
    %v604 = vpop.f32.mrb[0].mxu0
    %v605 = vpop.f32.mrb[0].mxu0
    %v606 = vadd.f32 %v72, %v605
    %v607 = vpop.f32.mrb[0].mxu0
    %608 = vmatprep.mubr.bf16.mxu0 0
    %609 = vmatmul.mubr.bf16.gmra.mrb[0].mxu0 %v563
    %v610 = vpop.f32.mrb[0].mxu0
    %v611 = vadd.f32 %v72, %v610
    %v612 = vpop.f32.mrb[0].mxu0
    %v613 = vpop.f32.mrb[0].mxu0
    %v614 = vadd.f32 %v72, %v613
    %v615 = vpop.f32.mrb[0].mxu0
    %616 = vmatprep.mubr.bf16.mxu0 0
    %617 = vmatmul.mubr.bf16.gmra.mrb[0].mxu0 %v564
    %v618 = vpop.f32.mrb[0].mxu0
    %v619 = vadd.f32 %v72, %v618
    %v620 = vpop.f32.mrb[0].mxu0
    %v621 = vpop.f32.mrb[0].mxu0
    %v622 = vadd.f32 %v72, %v621
    %v623 = vpop.f32.mrb[0].mxu0
    %624 = vmatprep.mubr.bf16.mxu0 0
    %625 = vmatmul.mubr.bf16.gmra.mrb[0].mxu0 %v565
    %v626 = vpop.f32.mrb[0].mxu0
    %v627 = vadd.f32 %v72, %v626
    %v628 = vpop.f32.mrb[0].mxu0
    %v629 = vpop.f32.mrb[0].mxu0
    %v630 = vadd.f32 %v72, %v629
    %v631 = vpop.f32.mrb[0].mxu0
    %632 = vmatprep.mubr.bf16.mxu0 0
    %633 = vmatmul.mubr.bf16.gmra.mrb[0].mxu0 %v566
    %v634 = vpop.f32.mrb[0].mxu0
    %v635 = vadd.f32 %v72, %v634
    %v636 = vpop.f32.mrb[0].mxu0
    %v637 = vpop.f32.mrb[0].mxu0
    %v638 = vadd.f32 %v72, %v637
    %v639 = vpop.f32.mrb[0].mxu0
    %640 = vmatprep.mubr.bf16.mxu0 0
    %641 = vmatmul.mubr.bf16.gmra.mrb[0].mxu0 %v567
    %v642 = vpop.f32.mrb[0].mxu0
    %v643 = vadd.f32 %v72, %v642
    %v644 = vpop.f32.mrb[0].mxu0
    %v645 = vpop.f32.mrb[0].mxu0
    %v646 = vadd.f32 %v72, %v645
    %v647 = vpop.f32.mrb[0].mxu0
    %648 = vdwg.mxu0
    %v649 = vmul.f32 %v603, %v603
    %v650 = vmul.f32 %v606, %v606
    %v651 = vmul.f32 %v611, %v611
    %v652 = vmul.f32 %v614, %v614
    %v653 = vmul.f32 %v619, %v619
    %v654 = vmul.f32 %v622, %v622
    %v655 = vmul.f32 %v627, %v627
    %v656 = vmul.f32 %v630, %v630
    %v657 = vmul.f32 %v635, %v635
    %v658 = vmul.f32 %v638, %v638
    %v659 = vmul.f32 %v643, %v643
    %v660 = vmul.f32 %v646, %v646
    %661 = vadd.xlane.f32.xlu0 %v649
    %v662 = vpop.xlane.xlu0 %661
    %663 = vadd.xlane.f32.xlu0 %v650
    %v664 = vpop.xlane.xlu0 %663
    %665 = vadd.xlane.f32.xlu0 %v651
    %v666 = vpop.xlane.xlu0 %665
    %667 = vadd.xlane.f32.xlu0 %v652
    %v668 = vpop.xlane.xlu0 %667
    %669 = vadd.xlane.f32.xlu0 %v653
    %v670 = vpop.xlane.xlu0 %669
    %671 = vadd.xlane.f32.xlu0 %v654
    %v672 = vpop.xlane.xlu0 %671
    %673 = vadd.xlane.f32.xlu0 %v655
    %v674 = vpop.xlane.xlu0 %673
    %675 = vadd.xlane.f32.xlu0 %v656
    %v676 = vpop.xlane.xlu0 %675
    %677 = vadd.xlane.f32.xlu0 %v657
    %v678 = vpop.xlane.xlu0 %677
    %679 = vadd.xlane.f32.xlu0 %v658
    %v680 = vpop.xlane.xlu0 %679
    %681 = vadd.xlane.f32.xlu0 %v659
    %v682 = vpop.xlane.xlu0 %681
    %683 = vadd.xlane.f32.xlu0 %v660
    %v684 = vpop.xlane.xlu0 %683
    %v685 = vrsqrt.pop %v662
    %v686 = vmul.f32 %v662, %v685
    %vm687 = vcmp.eq.f32.partialorder %v662, inf
    %v688 = vsel %vm687, %v662, %v686
    %vm689 = vcmp.eq.f32.partialorder %v662, 0.0
    %v690 = vand.u32 %v662, 2147483648
    %v691 = vsel %vm689, %v690, %v688
    %v692 = vrsqrt.pop %v664
    %v693 = vmul.f32 %v664, %v692
    %vm694 = vcmp.eq.f32.partialorder %v664, inf
    %v695 = vsel %vm694, %v664, %v693
    %vm696 = vcmp.eq.f32.partialorder %v664, 0.0
    %v697 = vand.u32 %v664, 2147483648
    %v698 = vsel %vm696, %v697, %v695
    %v699 = vrsqrt.pop %v666
    %v700 = vmul.f32 %v666, %v699
    %vm701 = vcmp.eq.f32.partialorder %v666, inf
    %v702 = vsel %vm701, %v666, %v700
    %vm703 = vcmp.eq.f32.partialorder %v666, 0.0
    %v704 = vand.u32 %v666, 2147483648
    %v705 = vsel %vm703, %v704, %v702
    %v706 = vrsqrt.pop %v668
    %v707 = vmul.f32 %v668, %v706
    %vm708 = vcmp.eq.f32.partialorder %v668, inf
    %v709 = vsel %vm708, %v668, %v707
    %vm710 = vcmp.eq.f32.partialorder %v668, 0.0
    %v711 = vand.u32 %v668, 2147483648
    %v712 = vsel %vm710, %v711, %v709
    %v713 = vrsqrt.pop %v670
    %v714 = vmul.f32 %v670, %v713
    %vm715 = vcmp.eq.f32.partialorder %v670, inf
    %v716 = vsel %vm715, %v670, %v714
    %vm717 = vcmp.eq.f32.partialorder %v670, 0.0
    %v718 = vand.u32 %v670, 2147483648
    %v719 = vsel %vm717, %v718, %v716
    %v720 = vrsqrt.pop %v672
    %v721 = vmul.f32 %v672, %v720
    %vm722 = vcmp.eq.f32.partialorder %v672, inf
    %v723 = vsel %vm722, %v672, %v721
    %vm724 = vcmp.eq.f32.partialorder %v672, 0.0
    %v725 = vand.u32 %v672, 2147483648
    %v726 = vsel %vm724, %v725, %v723
    %v727 = vrsqrt.pop %v674
    %v728 = vmul.f32 %v674, %v727
    %vm729 = vcmp.eq.f32.partialorder %v674, inf
    %v730 = vsel %vm729, %v674, %v728
    %vm731 = vcmp.eq.f32.partialorder %v674, 0.0
    %v732 = vand.u32 %v674, 2147483648
    %v733 = vsel %vm731, %v732, %v730
    %v734 = vrsqrt.pop %v676
    %v735 = vmul.f32 %v676, %v734
    %vm736 = vcmp.eq.f32.partialorder %v676, inf
    %v737 = vsel %vm736, %v676, %v735
    %vm738 = vcmp.eq.f32.partialorder %v676, 0.0
    %v739 = vand.u32 %v676, 2147483648
    %v740 = vsel %vm738, %v739, %v737
    %v741 = vrsqrt.pop %v678
    %v742 = vmul.f32 %v678, %v741
    %vm743 = vcmp.eq.f32.partialorder %v678, inf
    %v744 = vsel %vm743, %v678, %v742
    %vm745 = vcmp.eq.f32.partialorder %v678, 0.0
    %v746 = vand.u32 %v678, 2147483648
    %v747 = vsel %vm745, %v746, %v744
    %v748 = vrsqrt.pop %v680
    %v749 = vmul.f32 %v680, %v748
    %vm750 = vcmp.eq.f32.partialorder %v680, inf
    %v751 = vsel %vm750, %v680, %v749
    %vm752 = vcmp.eq.f32.partialorder %v680, 0.0
    %v753 = vand.u32 %v680, 2147483648
    %v754 = vsel %vm752, %v753, %v751
    %v755 = vrsqrt.pop %v682
    %v756 = vmul.f32 %v682, %v755
    %vm757 = vcmp.eq.f32.partialorder %v682, inf
    %v758 = vsel %vm757, %v682, %v756
    %vm759 = vcmp.eq.f32.partialorder %v682, 0.0
    %v760 = vand.u32 %v682, 2147483648
    %v761 = vsel %vm759, %v760, %v758
    %v762 = vrsqrt.pop %v684
    %v763 = vmul.f32 %v684, %v762
    %vm764 = vcmp.eq.f32.partialorder %v684, inf
    %v765 = vsel %vm764, %v684, %v763
    %vm766 = vcmp.eq.f32.partialorder %v684, 0.0
    %v767 = vand.u32 %v684, 2147483648
    %v768 = vsel %vm766, %v767, %v765
    %v769 = vsub.bf16 %v223, %v556
    %v770 = vsub.bf16 %v224, %v557
    %v771 = vsub.bf16 %v225, %v558
    %v772 = vsub.bf16 %v226, %v559
    %v773 = vsub.bf16 %v227, %v560
    %v774 = vsub.bf16 %v228, %v561
    %775 = vmatprep.subr.bf16.mxu0 0
    %776 = vmatpush1.bf16.msra.mxu0 %v267
    %777 = vmatprep.subr.bf16.mxu0 0
    %778 = vmatpush1.bf16.msra.mxu0 %v268
    %779 = vmatprep.subr.bf16.mxu0 0
    %780 = vmatpush1.bf16.msra.mxu0 %v269
    %781 = vmatprep.subr.bf16.mxu0 0
    %782 = vmatpush1.bf16.msra.mxu0 %v270
    %783 = vmatprep.subr.bf16.mxu0 0
    %784 = vmatpush1.bf16.msra.mxu0 %v271
    %785 = vmatprep.subr.bf16.mxu0 0
    %786 = vmatpush1.bf16.msra.mxu0 %v272
    %787 = vmatprep.subr.bf16.mxu0 0
    %788 = vmatpush1.bf16.msra.mxu0 %v273
    %789 = vmatprep.subr.bf16.mxu0 0
    %790 = vmatpush1.bf16.msra.mxu0 %v274
    %791 = vmatprep.subr.bf16.mxu0 0
    %792 = vmatpush1.bf16.msra.mxu0 0
    %793 = vmatprep.subr.bf16.mxu0 0
    %794 = vmatpush1.bf16.msra.mxu0 0
    %795 = vmatprep.subr.bf16.mxu0 0
    %796 = vmatpush1.bf16.msra.mxu0 0
    %797 = vmatprep.subr.bf16.mxu0 0
    %798 = vmatpush1.bf16.msra.mxu0 0
    %799 = vmatprep.subr.bf16.mxu0 0
    %800 = vmatpush1.bf16.msra.mxu0 0
    %801 = vmatprep.subr.bf16.mxu0 0
    %802 = vmatpush1.bf16.msra.mxu0 0
    %803 = vmatprep.subr.bf16.mxu0 0
    %804 = vmatpush1.bf16.msra.mxu0 0
    %805 = vmatprep.subr.bf16.mxu0 0
    %806 = vmatpush1.bf16.msra.mxu0 0
    %807 = vmatprep.mubr.bf16.mxu0 0
    %808 = vmatmul.mubr.bf16.gmra.mrb[0].mxu0 %v769
    %v809 = vpop.f32.mrb[0].mxu0
    %v810 = vadd.f32 %v72, %v809
    %v811 = vpop.f32.mrb[0].mxu0
    %v812 = vpop.f32.mrb[0].mxu0
    %v813 = vadd.f32 %v72, %v812
    %v814 = vpop.f32.mrb[0].mxu0
    %815 = vmatprep.mubr.bf16.mxu0 0
    %816 = vmatmul.mubr.bf16.gmra.mrb[0].mxu0 %v770
    %v817 = vpop.f32.mrb[0].mxu0
    %v818 = vadd.f32 %v72, %v817
    %v819 = vpop.f32.mrb[0].mxu0
    %v820 = vpop.f32.mrb[0].mxu0
    %v821 = vadd.f32 %v72, %v820
    %v822 = vpop.f32.mrb[0].mxu0
    %823 = vmatprep.mubr.bf16.mxu0 0
    %824 = vmatmul.mubr.bf16.gmra.mrb[0].mxu0 %v771
    %v825 = vpop.f32.mrb[0].mxu0
    %v826 = vadd.f32 %v72, %v825
    %v827 = vpop.f32.mrb[0].mxu0
    %v828 = vpop.f32.mrb[0].mxu0
    %v829 = vadd.f32 %v72, %v828
    %v830 = vpop.f32.mrb[0].mxu0
    %831 = vmatprep.mubr.bf16.mxu0 0
    %832 = vmatmul.mubr.bf16.gmra.mrb[0].mxu0 %v772
    %v833 = vpop.f32.mrb[0].mxu0
    %v834 = vadd.f32 %v72, %v833
    %v835 = vpop.f32.mrb[0].mxu0
    %v836 = vpop.f32.mrb[0].mxu0
    %v837 = vadd.f32 %v72, %v836
    %v838 = vpop.f32.mrb[0].mxu0
    %839 = vmatprep.mubr.bf16.mxu0 0
    %840 = vmatmul.mubr.bf16.gmra.mrb[0].mxu0 %v773
    %v841 = vpop.f32.mrb[0].mxu0
    %v842 = vadd.f32 %v72, %v841
    %v843 = vpop.f32.mrb[0].mxu0
    %v844 = vpop.f32.mrb[0].mxu0
    %v845 = vadd.f32 %v72, %v844
    %v846 = vpop.f32.mrb[0].mxu0
    %847 = vmatprep.mubr.bf16.mxu0 0
    %848 = vmatmul.mubr.bf16.gmra.mrb[0].mxu0 %v774
    %v849 = vpop.f32.mrb[0].mxu0
    %v850 = vadd.f32 %v72, %v849
    %v851 = vpop.f32.mrb[0].mxu0
    %v852 = vpop.f32.mrb[0].mxu0
    %v853 = vadd.f32 %v72, %v852
    %v854 = vpop.f32.mrb[0].mxu0
    %855 = vdwg.mxu0
    %v856 = vmul.f32 %v810, %v810
    %v857 = vmul.f32 %v813, %v813
    %v858 = vmul.f32 %v818, %v818
    %v859 = vmul.f32 %v821, %v821
    %v860 = vmul.f32 %v826, %v826
    %v861 = vmul.f32 %v829, %v829
    %v862 = vmul.f32 %v834, %v834
    %v863 = vmul.f32 %v837, %v837
    %v864 = vmul.f32 %v842, %v842
    %v865 = vmul.f32 %v845, %v845
    %v866 = vmul.f32 %v850, %v850
    %v867 = vmul.f32 %v853, %v853
    %868 = vadd.xlane.f32.xlu0 %v856
    %v869 = vpop.xlane.xlu0 %868
    %870 = vadd.xlane.f32.xlu0 %v857
    %v871 = vpop.xlane.xlu0 %870
    %872 = vadd.xlane.f32.xlu0 %v858
    %v873 = vpop.xlane.xlu0 %872
    %874 = vadd.xlane.f32.xlu0 %v859
    %v875 = vpop.xlane.xlu0 %874
    %876 = vadd.xlane.f32.xlu0 %v860
    %v877 = vpop.xlane.xlu0 %876
    %878 = vadd.xlane.f32.xlu0 %v861
    %v879 = vpop.xlane.xlu0 %878
    %880 = vadd.xlane.f32.xlu0 %v862
    %v881 = vpop.xlane.xlu0 %880
    %882 = vadd.xlane.f32.xlu0 %v863
    %v883 = vpop.xlane.xlu0 %882
    %884 = vadd.xlane.f32.xlu0 %v864
    %v885 = vpop.xlane.xlu0 %884
    %886 = vadd.xlane.f32.xlu0 %v865
    %v887 = vpop.xlane.xlu0 %886
    %888 = vadd.xlane.f32.xlu0 %v866
    %v889 = vpop.xlane.xlu0 %888
    %890 = vadd.xlane.f32.xlu0 %v867
    %v891 = vpop.xlane.xlu0 %890
    %v892 = vrsqrt.pop %v869
    %v893 = vmul.f32 %v869, %v892
    %vm894 = vcmp.eq.f32.partialorder %v869, inf
    %v895 = vsel %vm894, %v869, %v893
    %vm896 = vcmp.eq.f32.partialorder %v869, 0.0
    %v897 = vand.u32 %v869, 2147483648
    %v898 = vsel %vm896, %v897, %v895
    %v899 = vrsqrt.pop %v871
    %v900 = vmul.f32 %v871, %v899
    %vm901 = vcmp.eq.f32.partialorder %v871, inf
    %v902 = vsel %vm901, %v871, %v900
    %vm903 = vcmp.eq.f32.partialorder %v871, 0.0
    %v904 = vand.u32 %v871, 2147483648
    %v905 = vsel %vm903, %v904, %v902
    %v906 = vrsqrt.pop %v873
    %v907 = vmul.f32 %v873, %v906
    %vm908 = vcmp.eq.f32.partialorder %v873, inf
    %v909 = vsel %vm908, %v873, %v907
    %vm910 = vcmp.eq.f32.partialorder %v873, 0.0
    %v911 = vand.u32 %v873, 2147483648
    %v912 = vsel %vm910, %v911, %v909
    %v913 = vrsqrt.pop %v875
    %v914 = vmul.f32 %v875, %v913
    %vm915 = vcmp.eq.f32.partialorder %v875, inf
    %v916 = vsel %vm915, %v875, %v914
    %vm917 = vcmp.eq.f32.partialorder %v875, 0.0
    %v918 = vand.u32 %v875, 2147483648
    %v919 = vsel %vm917, %v918, %v916
    %v920 = vrsqrt.pop %v877
    %v921 = vmul.f32 %v877, %v920
    %vm922 = vcmp.eq.f32.partialorder %v877, inf
    %v923 = vsel %vm922, %v877, %v921
    %vm924 = vcmp.eq.f32.partialorder %v877, 0.0
    %v925 = vand.u32 %v877, 2147483648
    %v926 = vsel %vm924, %v925, %v923
    %v927 = vrsqrt.pop %v879
    %v928 = vmul.f32 %v879, %v927
    %vm929 = vcmp.eq.f32.partialorder %v879, inf
    %v930 = vsel %vm929, %v879, %v928
    %vm931 = vcmp.eq.f32.partialorder %v879, 0.0
    %v932 = vand.u32 %v879, 2147483648
    %v933 = vsel %vm931, %v932, %v930
    %v934 = vrsqrt.pop %v881
    %v935 = vmul.f32 %v881, %v934
    %vm936 = vcmp.eq.f32.partialorder %v881, inf
    %v937 = vsel %vm936, %v881, %v935
    %vm938 = vcmp.eq.f32.partialorder %v881, 0.0
    %v939 = vand.u32 %v881, 2147483648
    %v940 = vsel %vm938, %v939, %v937
    %v941 = vrsqrt.pop %v883
    %v942 = vmul.f32 %v883, %v941
    %vm943 = vcmp.eq.f32.partialorder %v883, inf
    %v944 = vsel %vm943, %v883, %v942
    %vm945 = vcmp.eq.f32.partialorder %v883, 0.0
    %v946 = vand.u32 %v883, 2147483648
    %v947 = vsel %vm945, %v946, %v944
    %v948 = vrsqrt.pop %v885
    %v949 = vmul.f32 %v885, %v948
    %vm950 = vcmp.eq.f32.partialorder %v885, inf
    %v951 = vsel %vm950, %v885, %v949
    %vm952 = vcmp.eq.f32.partialorder %v885, 0.0
    %v953 = vand.u32 %v885, 2147483648
    %v954 = vsel %vm952, %v953, %v951
    %v955 = vrsqrt.pop %v887
    %v956 = vmul.f32 %v887, %v955
    %vm957 = vcmp.eq.f32.partialorder %v887, inf
    %v958 = vsel %vm957, %v887, %v956
    %vm959 = vcmp.eq.f32.partialorder %v887, 0.0
    %v960 = vand.u32 %v887, 2147483648
    %v961 = vsel %vm959, %v960, %v958
    %v962 = vrsqrt.pop %v889
    %v963 = vmul.f32 %v889, %v962
    %vm964 = vcmp.eq.f32.partialorder %v889, inf
    %v965 = vsel %vm964, %v889, %v963
    %vm966 = vcmp.eq.f32.partialorder %v889, 0.0
    %v967 = vand.u32 %v889, 2147483648
    %v968 = vsel %vm966, %v967, %v965
    %v969 = vrsqrt.pop %v891
    %v970 = vmul.f32 %v891, %v969
    %vm971 = vcmp.eq.f32.partialorder %v891, inf
    %v972 = vsel %vm971, %v891, %v970
    %vm973 = vcmp.eq.f32.partialorder %v891, 0.0
    %v974 = vand.u32 %v891, 2147483648
    %v975 = vsel %vm973, %v974, %v972
    %v976 = vmin.f32 %v691, %v898
    %v977 = vmin.f32 %v698, %v905
    %v978 = vmin.f32 %v705, %v912
    %v979 = vmin.f32 %v712, %v919
    %v980 = vmin.f32 %v719, %v926
    %v981 = vmin.f32 %v726, %v933
    %v982 = vmin.f32 %v733, %v940
    %v983 = vmin.f32 %v740, %v947
    %v984 = vmin.f32 %v747, %v954
    %v985 = vmin.f32 %v754, %v961
    %v986 = vmin.f32 %v761, %v968
    %v987 = vmin.f32 %v768, %v975
    %v988 = vsub.f32 %v406, %v976
    %v989 = vsub.f32 %v413, %v977
    %v990 = vsub.f32 %v420, %v978
    %v991 = vsub.f32 %v427, %v979
    %v992 = vsub.f32 %v434, %v980
    %v993 = vsub.f32 %v441, %v981
    %v994 = vsub.f32 %v448, %v982
    %v995 = vsub.f32 %v455, %v983
    %v996 = vsub.f32 %v462, %v984
    %v997 = vsub.f32 %v469, %v985
    %v998 = vsub.f32 %v476, %v986
    %v999 = vsub.f32 %v483, %v987
    %v1000 = vadd.f32 %v988, 1.0
    %v1001 = vadd.f32 %v989, 1.0
    %v1002 = vadd.f32 %v990, 1.0
    %v1003 = vadd.f32 %v991, 1.0
    %v1004 = vadd.f32 %v992, 1.0
    %v1005 = vadd.f32 %v993, 1.0
    %v1006 = vadd.f32 %v994, 1.0
    %v1007 = vadd.f32 %v995, 1.0
    %v1008 = vadd.f32 %v996, 1.0
    %v1009 = vadd.f32 %v997, 1.0
    %v1010 = vadd.f32 %v998, 1.0
    %v1011 = vadd.f32 %v999, 1.0
    %v1012 = vmax.f32 %v1000, 0.0
    %v1013 = vmax.f32 %v1001, 0.0
    %v1014 = vmax.f32 %v1002, 0.0
    %v1015 = vmax.f32 %v1003, 0.0
    %v1016 = vmax.f32 %v1004, 0.0
    %v1017 = vmax.f32 %v1005, 0.0
    %v1018 = vmax.f32 %v1006, 0.0
    %v1019 = vmax.f32 %v1007, 0.0
    %v1020 = vmax.f32 %v1008, 0.0
    %v1021 = vmax.f32 %v1009, 0.0
    %v1022 = vmax.f32 %v1010, 0.0
    %v1023 = vmax.f32 %v1011, 0.0
    %s1024 = sadd.s32 0, 0
    %s1025 = smul.u32 %s1024, 96
    %v1026 = vlaneseq
    %v1027 = vshrl.u32 %v1026, 7
    %v1028 = vadd.s32 %v1027, 8
    %v1029 = vadd.s32 %v1027, 16
    %v1030 = vadd.s32 %v1027, 24
    %v1031 = vadd.s32 %v1027, 32
    %v1032 = vadd.s32 %v1027, 40
    %v1033 = vadd.s32 %v1027, 48
    %v1034 = vadd.s32 %v1027, 56
    %v1035 = vadd.s32 %v1027, 64
    %v1036 = vadd.s32 %v1027, 72
    %v1037 = vadd.s32 %v1027, 80
    %v1038 = vadd.s32 %v1027, 88
    %v1039 = vstv %s1025
    %v1040 = vadd.s32 %v1039, %v1027
    %v1041 = vadd.s32 %v1039, %v1028
    %v1042 = vadd.s32 %v1039, %v1029
    %v1043 = vadd.s32 %v1039, %v1030
    %v1044 = vadd.s32 %v1039, %v1031
    %v1045 = vadd.s32 %v1039, %v1032
    %v1046 = vadd.s32 %v1039, %v1033
    %v1047 = vadd.s32 %v1039, %v1034
    %v1048 = vadd.s32 %v1039, %v1035
    %v1049 = vadd.s32 %v1039, %v1036
    %v1050 = vadd.s32 %v1039, %v1037
    %v1051 = vadd.s32 %v1039, %v1038
    %vm1052 = vcmp.lt.s32.totalorder %v1040, 96
    %vm1053 = vcmp.lt.s32.totalorder %v1041, 96
    %vm1054 = vcmp.lt.s32.totalorder %v1042, 96
    %vm1055 = vcmp.lt.s32.totalorder %v1043, 96
    %vm1056 = vcmp.lt.s32.totalorder %v1044, 96
    %vm1057 = vcmp.lt.s32.totalorder %v1045, 96
    %vm1058 = vcmp.lt.s32.totalorder %v1046, 96
    %vm1059 = vcmp.lt.s32.totalorder %v1047, 96
    %vm1060 = vcmp.lt.s32.totalorder %v1048, 96
    %vm1061 = vcmp.lt.s32.totalorder %v1049, 96
    %vm1062 = vcmp.lt.s32.totalorder %v1050, 96
    %vm1063 = vcmp.lt.s32.totalorder %v1051, 96
    %v1064 = vsel %vm1052, %v1012, 0.0
    %v1065 = vsel %vm1053, %v1013, 0.0
    %v1066 = vsel %vm1054, %v1014, 0.0
    %v1067 = vsel %vm1055, %v1015, 0.0
    %v1068 = vsel %vm1056, %v1016, 0.0
    %v1069 = vsel %vm1057, %v1017, 0.0
    %v1070 = vsel %vm1058, %v1018, 0.0
    %v1071 = vsel %vm1059, %v1019, 0.0
    %v1072 = vsel %vm1060, %v1020, 0.0
    %v1073 = vsel %vm1061, %v1021, 0.0
    %v1074 = vsel %vm1062, %v1022, 0.0
    %v1075 = vsel %vm1063, %v1023, 0.0
    %v1076 = vld [vmem:[#allocation2] sm:$0x1]
    %vm1077 = vcmask 7168
    %v1078 = vsel %vm1077, %v1064, 0.0
    %v1079 = vsel %vm1077, %v1065, 0.0
    %v1080 = vadd.f32 %v1078, %v1079
    %v1081 = vsel %vm1077, %v1066, 0.0
    %v1082 = vadd.f32 %v1080, %v1081
    %v1083 = vsel %vm1077, %v1067, 0.0
    %v1084 = vadd.f32 %v1082, %v1083
    %v1085 = vsel %vm1077, %v1068, 0.0
    %v1086 = vadd.f32 %v1084, %v1085
    %v1087 = vsel %vm1077, %v1069, 0.0
    %v1088 = vadd.f32 %v1086, %v1087
    %v1089 = vsel %vm1077, %v1070, 0.0
    %v1090 = vadd.f32 %v1088, %v1089
    %v1091 = vsel %vm1077, %v1071, 0.0
    %v1092 = vadd.f32 %v1090, %v1091
    %v1093 = vsel %vm1077, %v1072, 0.0
    %v1094 = vadd.f32 %v1092, %v1093
    %v1095 = vsel %vm1077, %v1073, 0.0
    %v1096 = vadd.f32 %v1094, %v1095
    %v1097 = vsel %vm1077, %v1074, 0.0
    %v1098 = vadd.f32 %v1096, %v1097
    %v1099 = vsel %vm1077, %v1075, 0.0
    %v1100 = vadd.f32 %v1098, %v1099
    %1101 = vadd.xlane.f32.xlu0 %v1100
    %v1102 = vpop.xlane.xlu0 %1101
    %v1103 = vrot.slane %v1102, 4
    %v1104 = vadd.f32 %v1102, %v1103
    %v1105 = vrot.slane %v1104, 2
    %v1106 = vadd.f32 %v1104, %v1105
    %v1107 = vrot.slane %v1106, 1
    %v1108 = vadd.f32 %v1106, %v1107
    %s1109 = vtos %v1108
    %v1110 = vstv %s1109
    %v1111 = vadd.f32 %v1076, %v1110
    %vm1112 = vcmask 0
    %1113 = vst.msk [vmem:[#allocation2] sm:$0x1] %vm1112, %v1111
    // Predicated region
    $region14: #{tpu_custom_call.1} parent=1 // pred_check
      %p1114 = pneg %p35
    $region15: #{tpu_custom_call.1} parent=1 // pred_check_branch
      %1116 = sbr.rel (%p1114) target = $region17
    $region16: #{tpu_custom_call.1} parent=1 // pred_region
      %v1117 = vld [vmem:[#allocation2] sm:$0x1]
      %v1119 = vlaneseq
      %v1120 = vshrl.u32 %v1119, 7
      %v1121 = vsub.s32 0, %v1120
      %v1122 = vrot.slane %v1117, %v1121
      %1123 = vset.pattern.permute.xlu0 0
      %1124 = vperm.xlu0 %1123, %v1122
      %v1125 = vpop.permute.xlu0 %1124
      %1127 = vst [vmem:[#allocation3] sm:$0xff] %v1125
    $region17: #{tpu_custom_call.1} parent=1 // pred_fallthru
      _
    // Predicated region
    $region18: #{tpu_custom_call.1} parent=1 // pred_check
      _
    $region19: #{tpu_custom_call.1} parent=1 // pred_check_branch
      %1129 = sbr.rel (0) target = $region21
    $region20: #{tpu_custom_call.1} parent=1 // pred_region
      %s1131 = ssub.s32 128, 128
      %1132 = vsyncadd [#allocation4], %s1131
      %s1134 = sshll.u32 [#allocation3], 4
      %s1135 = int_to_ptr.vmem [resolvable:$true] %s1134
      %1137 = dma.vmem_to_hbm [thread:$0]  %s1135, 128, %s2, [#allocation4]
    $region21: #{tpu_custom_call.1} parent=1 // pred_fallthru
      _
    // Predicated region
    $region22: #{tpu_custom_call.1} parent=1 // pred_check
      _
    $region23: #{tpu_custom_call.1} parent=1 // pred_check_branch
      %1139 = sbr.rel (0) target = $region25
    $region24: #{tpu_custom_call.1} parent=1 // pred_region
      %1140 = dma.done [#allocation4], 128
    $region25: #{tpu_custom_call.1} parent=1 // pred_fallthru
      _
    %1141 = vsyncpa [#allocation4], 1

</llo_original>
